<compile_context>
chip_gen: v7x
topology: tpu7x:2x2x1
jax: 0.10.0
libtpu: 0.0.40
codegen_flags: <defaults>
</compile_context>

<pallas_src>
import functools

import jax
import jax.numpy as jnp
from jax.experimental import pallas as pl
from jax.experimental.pallas import tpu as pltpu


_LANE = 128


def _round_up(a, b):
    return (a + b - 1) // b * b


def _choose_tile(n, tile_n_req):
    """Lane-aligned batch tile; >= 2 tiles when n > 128 (v7x megacore)."""
    if n <= _LANE:
        return n                                   # single full-array tile
    tile = max(_LANE, (tile_n_req // _LANE) * _LANE)
    half = _round_up((n + 1) // 2, _LANE)          # keep at least 2 grid steps
    return min(tile, half)


def _make_club_kernel(y_dim, n, tile_n):
    needs_mask = (n % tile_n) != 0

    def kernel(xt_ref, yt_ref, ypt_ref, w1t_ref, b1t_ref, w2t_ref, b2t_ref,
               out_ref):
        # Batch lives on the lane axis: every tensor below is [feat, tile_n].
        xt = xt_ref[...].astype(jnp.bfloat16)           # in-VMEM cast, [x_dim, T]

        # Fused first layer of both branches: h = relu(W1^T x + b1)   [2H, T]
        h = jnp.dot(w1t_ref[...], xt,
                    preferred_element_type=jnp.float32) + b1t_ref[...]
        h = jnp.maximum(h, 0.0)

        # Fused second layer (block-diagonal W2^T): z = [mu ; pre_lv] [2*y_dim, T]
        z = jnp.dot(w2t_ref[...], h.astype(jnp.bfloat16),
                    preferred_element_type=jnp.float32) + b2t_ref[...]

        mu = z[:y_dim, :]                               # [y_dim, T]
        lv = jnp.tanh(z[y_dim:, :])                     # [y_dim, T]
        y = yt_ref[...]
        yp = ypt_ref[...]

        # pos - neg = -(mu-y)^2/exp(lv) + (mu-yp)^2/exp(lv)
        #           = (y - yp) * (2*mu - y - yp) * exp(-lv)
        diff = (y - yp) * (2.0 * mu - y - yp) * jnp.exp(-lv)

        if needs_mask:
            # Ragged last tile: columns >= n hold unspecified data.  Use a
            # select on the final diff (never a multiply) so NaN/Inf garbage
            # cannot reach the sum.
            col = (pl.program_id(0) * tile_n
                   + jax.lax.broadcasted_iota(jnp.int32, diff.shape, 1))
            diff = jnp.where(col < n, diff, 0.0)

        out_ref[...] = jnp.sum(diff).reshape(1, 1, 1)

    return kernel


def pack_params(params):
    """Fuse both branches into transposed, MXU-ready weights (batch-on-lanes).

    Returns:
      w1t : [2H, x_dim]    bf16   rows [0:H] = mu branch, [H:2H] = lv branch
      b1t : [2H, 1]        f32
      w2t : [2*y_dim, 2H]  bf16   block-diagonal
      b2t : [2*y_dim, 1]   f32
    """
    w1t = jnp.concatenate([params["w1m"].T, params["w1l"].T],
                          axis=0).astype(jnp.bfloat16)
    b1t = jnp.concatenate([params["b1m"], params["b1l"]],
                          axis=1).T.astype(jnp.float32)
    h = params["w2m"].shape[0]
    y_dim = params["w2m"].shape[1]
    zero = jnp.zeros((y_dim, h), jnp.float32)
    w2t = jnp.block([[params["w2m"].T, zero],
                     [zero, params["w2l"].T]]).astype(jnp.bfloat16)
    b2t = jnp.concatenate([params["b2m"], params["b2l"]],
                          axis=1).T.astype(jnp.float32)
    return dict(w1t=w1t, b1t=b1t, w2t=w2t, b2t=b2t)


@functools.partial(jax.jit, static_argnames=("tile_n",))
def club_forward(x, y, y_perm, packed, *, tile_n=2048):
    """CLUB forward: mean_i sum_j (pos - neg) / 2 via a Pallas TPU kernel.

    Takes the module's orientation (x: [N, x_dim], y/y_perm: [N, y_dim]);
    the batch-on-lanes transposes are layout plumbing done inside this jit.
    """
    n, x_dim = x.shape
    y_dim = y.shape[1]
    w1t, b1t, w2t, b2t = packed["w1t"], packed["b1t"], packed["w2t"], packed["b2t"]
    h2 = w1t.shape[0]           # 2 * (m_dim // 2)
    y2 = w2t.shape[0]           # 2 * y_dim

    tile = _choose_tile(n, tile_n)
    num_tiles = pl.cdiv(n, tile)

    # Batch-on-lanes layout; no padding (ragged last tile masked in-kernel).
    xt = x.T                    # [x_dim, N] f32 (bf16 cast happens per-tile)
    yt = y.T                    # [y_dim, N]
    ypt = y_perm.T              # [y_dim, N]

    kernel = _make_club_kernel(y_dim, n, tile)

    flops = 2 * n * (x_dim * h2 + h2 * y2) + 10 * n * y_dim
    transcendentals = 2 * n * y_dim
    bytes_accessed = ((xt.size + yt.size + ypt.size) * 4
                      + (w1t.size + w2t.size) * 2
                      + (b1t.size + b2t.size) * 4
                      + num_tiles * 4)

    grid_spec = pltpu.PrefetchScalarGridSpec(
        num_scalar_prefetch=0,
        grid=(num_tiles,),
        in_specs=[
            pl.BlockSpec((x_dim, tile), lambda i: (0, i)),   # x^T tile
            pl.BlockSpec((y_dim, tile), lambda i: (0, i)),   # y^T tile
            pl.BlockSpec((y_dim, tile), lambda i: (0, i)),   # y_perm^T tile
            pl.BlockSpec((h2, x_dim), lambda i: (0, 0)),     # W1^T (resident)
            pl.BlockSpec((h2, 1), lambda i: (0, 0)),         # b1^T (resident)
            pl.BlockSpec((y2, h2), lambda i: (0, 0)),        # W2^T (resident)
            pl.BlockSpec((y2, 1), lambda i: (0, 0)),         # b2^T (resident)
        ],
        out_specs=pl.BlockSpec((1, 1, 1), lambda i: (i, 0, 0)),
    )

    partials = pl.pallas_call(
        kernel,
        out_shape=jax.ShapeDtypeStruct((num_tiles, 1, 1), jnp.float32),
        grid_spec=grid_spec,
        compiler_params=pltpu.CompilerParams(
            dimension_semantics=("parallel",),   # v7x: shard tiles across TCs
        ),
        cost_estimate=pl.CostEstimate(
            flops=flops,
            transcendentals=transcendentals,
            bytes_accessed=bytes_accessed,
        ),
    )(xt, yt, ypt, w1t, b1t, w2t, b2t)

    return jnp.sum(partials) / (2.0 * n)


def init_linear(key, fan_in, fan_out):
    # deterministic uniform init in [-1/sqrt(fan_in), 1/sqrt(fan_in)] (nn.Linear-like)
    kw, kb = jax.random.split(key)
    bound = 1.0 / jnp.sqrt(fan_in)
    w = jax.random.uniform(kw, (fan_in, fan_out), jnp.float32, -bound, bound)
    b = jax.random.uniform(kb, (1, fan_out), jnp.float32, -bound, bound)
    return w, b


def club_forward_ref_f32(x, y, y_perm, p):
    """Pure-f32 reference (matches the PyTorch module semantics)."""
    h_mu = jnp.maximum(x @ p["w1m"] + p["b1m"], 0.0)
    mu = h_mu @ p["w2m"] + p["b2m"]
    h_lv = jnp.maximum(x @ p["w1l"] + p["b1l"], 0.0)
    lv = jnp.tanh(h_lv @ p["w2l"] + p["b2l"])
    pos_v = -(mu - y) ** 2 / jnp.exp(lv)
    neg_v = -(mu - y_perm) ** 2 / jnp.exp(lv)
    return jnp.mean(pos_v.sum(-1) - neg_v.sum(-1)) / 2.0


def club_forward_ref_bf16(x, y, y_perm, packed):
    """Reference using the same packed / transposed bf16 matmuls as the kernel."""
    xt = x.T.astype(jnp.bfloat16)
    h = jnp.maximum(
        jnp.dot(packed["w1t"], xt, preferred_element_type=jnp.float32)
        + packed["b1t"], 0.0)
    z = jnp.dot(packed["w2t"], h.astype(jnp.bfloat16),
                preferred_element_type=jnp.float32) + packed["b2t"]
    y_dim = y.shape[1]
    mu = z[:y_dim, :].T
    lv = jnp.tanh(z[y_dim:, :]).T
    pos_v = -(mu - y) ** 2 / jnp.exp(lv)
    neg_v = -(mu - y_perm) ** 2 / jnp.exp(lv)
    return jnp.mean(pos_v.sum(-1) - neg_v.sum(-1)) / 2.0


if __name__ == "__main__":
    # Small shapes consistent with the module's forward: x:[N, x_dim], y:[N, y_dim].
    # N=200 is deliberately NOT a multiple of the 128-lane tile so the ragged
    # masking path and the 2-tile grid are both exercised.
    N, X_DIM, Y_DIM, M_DIM = 200, 32, 16, 32
    H = M_DIM // 2

    key = jax.random.PRNGKey(0)
    kx, ky, kp, k1, k2, k3, k4, kx2, ky2, kp2 = jax.random.split(key, 10)

    x = jax.random.normal(kx, (N, X_DIM), jnp.float32)
    y = jax.random.normal(ky, (N, Y_DIM), jnp.float32)

    # torch.randperm equivalent + gather stays in JAX glue.
    perm = jax.random.permutation(kp, N)
    y_perm = y[perm]

    w1m, b1m = init_linear(k1, X_DIM, H)
    w2m, b2m = init_linear(k2, H, Y_DIM)
    w1l, b1l = init_linear(k3, X_DIM, H)
    w2l, b2l = init_linear(k4, H, Y_DIM)
    params = dict(w1m=w1m, b1m=b1m, w2m=w2m, b2m=b2m,
                  w1l=w1l, b1l=b1l, w2l=w2l, b2l=b2l)
    packed = pack_params(params)

    u_bound = club_forward(x, y, y_perm, packed)
    u_bound = jax.block_until_ready(u_bound)

    # Tight check vs. a reference using the same packed bf16 matmuls.
    ref_bf16 = club_forward_ref_bf16(x, y, y_perm, packed)
    assert jnp.allclose(u_bound, ref_bf16, atol=1e-3, rtol=1e-3), (u_bound, ref_bf16)

    # Loose sanity check vs. the full-f32 module semantics (bf16 matmul rounding).
    ref_f32 = club_forward_ref_f32(x, y, y_perm, params)
    assert jnp.allclose(u_bound, ref_f32, atol=5e-2, rtol=5e-2), (u_bound, ref_f32)

    # Second run on a lane-divisible batch (exercises the mask-free trace).
    N2 = 256
    x2 = jax.random.normal(kx2, (N2, X_DIM), jnp.float32)
    y2 = jax.random.normal(ky2, (N2, Y_DIM), jnp.float32)
    y2_perm = y2[jax.random.permutation(kp2, N2)]
    u2 = jax.block_until_ready(club_forward(x2, y2, y2_perm, packed))
    ref2 = club_forward_ref_bf16(x2, y2, y2_perm, packed)
    assert jnp.allclose(u2, ref2, atol=1e-3, rtol=1e-3), (u2, ref2)

    print("KERNEL_OK")
</pallas_src>

<mosaic_0001>
module attributes {stable_mosaic.version = 11 : i64} {
  func.func @kernel(%arg0: i32, %arg1: memref<32x128xf32, #tpu.memory_space<vmem>>, %arg2: memref<16x128xf32, #tpu.memory_space<vmem>>, %arg3: memref<16x128xf32, #tpu.memory_space<vmem>>, %arg4: memref<32x32xbf16, #tpu.memory_space<vmem>>, %arg5: memref<32x1xf32, #tpu.memory_space<vmem>>, %arg6: memref<32x32xbf16, #tpu.memory_space<vmem>>, %arg7: memref<32x1xf32, #tpu.memory_space<vmem>>, %arg8: memref<1x1x1xf32, #tpu.memory_space<vmem>>) attributes {dimension_semantics = [#tpu.dimension_semantics<parallel>], iteration_bounds = array<i64: 2>, scalar_prefetch = 0 : i64, scratch_operands = 0 : i64, tpu.core_type = #tpu.core_type<tc>, window_params = [{transform_indices = @transform_0, window_bounds = array<i64: 32, 128>}, {transform_indices = @transform_1, window_bounds = array<i64: 16, 128>}, {transform_indices = @transform_2, window_bounds = array<i64: 16, 128>}, {pipeline_mode = #tpu.pipeline_mode<synchronous>, transform_indices = @transform_3, window_bounds = array<i64: 32, 32>}, {pipeline_mode = #tpu.pipeline_mode<synchronous>, transform_indices = @transform_4, window_bounds = array<i64: 32, 1>}, {pipeline_mode = #tpu.pipeline_mode<synchronous>, transform_indices = @transform_5, window_bounds = array<i64: 32, 32>}, {pipeline_mode = #tpu.pipeline_mode<synchronous>, transform_indices = @transform_6, window_bounds = array<i64: 32, 1>}, {transform_indices = @transform_7, window_bounds = array<i64: 1, 1, 1>}]} {
    %c0 = arith.constant 0 : index
    %c0_0 = arith.constant 0 : index
    %0 = vector.load %arg1[%c0, %c0_0] : memref<32x128xf32, #tpu.memory_space<vmem>>, vector<32x128xf32>
    %1 = arith.truncf %0 : vector<32x128xf32> to vector<32x128xbf16>
    %c0_1 = arith.constant 0 : index
    %c0_2 = arith.constant 0 : index
    %2 = vector.load %arg4[%c0_1, %c0_2] : memref<32x32xbf16, #tpu.memory_space<vmem>>, vector<32x32xbf16>
    %cst = arith.constant dense<0.000000e+00> : vector<32x128xf32>
    %3 = tpu.matmul %2, %1, %cst {dimension_numbers = #tpu.dot_dimension_numbers<[1], [0], [0], [1], [0, 0, 1, 1], [], []>} : vector<32x32xbf16>, vector<32x128xbf16>, vector<32x128xf32> -> vector<32x128xf32>
    %c0_3 = arith.constant 0 : index
    %c0_4 = arith.constant 0 : index
    %4 = vector.load %arg5[%c0_3, %c0_4] : memref<32x1xf32, #tpu.memory_space<vmem>>, vector<32x1xf32>
    %5 = vector.broadcast %4 : vector<32x1xf32> to vector<32x128xf32>
    %6 = arith.addf %3, %5 : vector<32x128xf32>
    %cst_5 = arith.constant 0.000000e+00 : f32
    %7 = vector.broadcast %cst_5 : f32 to vector<32x128xf32>
    %8 = arith.maximumf %6, %7 : vector<32x128xf32>
    %c0_6 = arith.constant 0 : index
    %c0_7 = arith.constant 0 : index
    %9 = vector.load %arg6[%c0_6, %c0_7] : memref<32x32xbf16, #tpu.memory_space<vmem>>, vector<32x32xbf16>
    %10 = arith.truncf %8 : vector<32x128xf32> to vector<32x128xbf16>
    %cst_8 = arith.constant dense<0.000000e+00> : vector<32x128xf32>
    %11 = tpu.matmul %9, %10, %cst_8 {dimension_numbers = #tpu.dot_dimension_numbers<[1], [0], [0], [1], [0, 0, 1, 1], [], []>} : vector<32x32xbf16>, vector<32x128xbf16>, vector<32x128xf32> -> vector<32x128xf32>
    %c0_9 = arith.constant 0 : index
    %c0_10 = arith.constant 0 : index
    %12 = vector.load %arg7[%c0_9, %c0_10] : memref<32x1xf32, #tpu.memory_space<vmem>>, vector<32x1xf32>
    %13 = vector.broadcast %12 : vector<32x1xf32> to vector<32x128xf32>
    %14 = arith.addf %11, %13 : vector<32x128xf32>
    %15 = vector.extract_strided_slice %14 {offsets = [0, 0], sizes = [16, 128], strides = [1, 1]} : vector<32x128xf32> to vector<16x128xf32>
    %16 = vector.extract_strided_slice %14 {offsets = [16, 0], sizes = [16, 128], strides = [1, 1]} : vector<32x128xf32> to vector<16x128xf32>
    %17 = math.tanh %16 : vector<16x128xf32>
    %c0_11 = arith.constant 0 : index
    %c0_12 = arith.constant 0 : index
    %18 = vector.load %arg2[%c0_11, %c0_12] : memref<16x128xf32, #tpu.memory_space<vmem>>, vector<16x128xf32>
    %c0_13 = arith.constant 0 : index
    %c0_14 = arith.constant 0 : index
    %19 = vector.load %arg3[%c0_13, %c0_14] : memref<16x128xf32, #tpu.memory_space<vmem>>, vector<16x128xf32>
    %20 = arith.subf %18, %19 : vector<16x128xf32>
    %cst_15 = arith.constant 2.000000e+00 : f32
    %21 = vector.broadcast %cst_15 : f32 to vector<16x128xf32>
    %22 = arith.mulf %21, %15 : vector<16x128xf32>
    %23 = arith.subf %22, %18 : vector<16x128xf32>
    %24 = arith.subf %23, %19 : vector<16x128xf32>
    %25 = arith.mulf %20, %24 : vector<16x128xf32>
    %cst_16 = arith.constant 0.000000e+00 : f32
    %26 = vector.broadcast %cst_16 : f32 to vector<16x128xf32>
    %27 = arith.subf %26, %17 : vector<16x128xf32>
    %28 = math.exp %27 : vector<16x128xf32>
    %29 = arith.mulf %25, %28 : vector<16x128xf32>
    %c128_i32 = arith.constant 128 : i32
    %30 = arith.muli %arg0, %c128_i32 : i32
    %31 = tpu.iota {dimensions = array<i32: 1>} : vector<16x128xi32>
    %32 = vector.broadcast %30 : i32 to vector<16x128xi32>
    %33 = arith.addi %32, %31 : vector<16x128xi32>
    %c200_i32 = arith.constant 200 : i32
    %34 = vector.broadcast %c200_i32 : i32 to vector<16x128xi32>
    %35 = arith.cmpi slt, %33, %34 : vector<16x128xi32>
    %cst_17 = arith.constant 0.000000e+00 : f32
    %36 = vector.broadcast %cst_17 : f32 to vector<16x128xf32>
    %37 = arith.select %35, %29, %36 : vector<16x128xi1>, vector<16x128xf32>
    %38 = vector.shape_cast %37 : vector<16x128xf32> to vector<1x16x128xf32>
    %cst_18 = arith.constant dense<0.000000e+00> : vector<1xf32>
    %39 = vector.multi_reduction <add>, %38, %cst_18 [1, 2] : vector<1x16x128xf32> to vector<1xf32>
    %40 = vector.shape_cast %39 : vector<1xf32> to vector<1x1x1xf32>
    %41 = vector.extract %40[0, 0, 0] : f32 from vector<1x1x1xf32>
    %42 = vector.broadcast %41 : f32 to vector<1x1x1xf32>
    %c0_19 = arith.constant 0 : index
    %c0_20 = arith.constant 0 : index
    %c0_21 = arith.constant 0 : index
    %43 = vector.load %arg8[%c0_19, %c0_20, %c0_21] : memref<1x1x1xf32, #tpu.memory_space<vmem>>, vector<1x1x1xf32>
    tpu.vector_store %arg8[%c0_19, %c0_20, %c0_21], %42 {strides = array<i32>} : memref<1x1x1xf32, #tpu.memory_space<vmem>>, vector<1x1x1xf32>,
    return
  }
  func.func @transform_0(%arg0: i32) -> (i32, i32) {
    %c0_i32 = arith.constant 0 : i32
    %c0_i32_0 = arith.constant 0 : i32
    return %c0_i32, %arg0 : i32, i32
  }
  func.func @transform_1(%arg0: i32) -> (i32, i32) {
    %c0_i32 = arith.constant 0 : i32
    %c0_i32_0 = arith.constant 0 : i32
    return %c0_i32, %arg0 : i32, i32
  }
  func.func @transform_2(%arg0: i32) -> (i32, i32) {
    %c0_i32 = arith.constant 0 : i32
    %c0_i32_0 = arith.constant 0 : i32
    return %c0_i32, %arg0 : i32, i32
  }
  func.func @transform_3(%arg0: i32) -> (i32, i32) {
    %c0_i32 = arith.constant 0 : i32
    %c0_i32_0 = arith.constant 0 : i32
    %c0_i32_1 = arith.constant 0 : i32
    return %c0_i32, %c0_i32_0 : i32, i32
  }
  func.func @transform_4(%arg0: i32) -> (i32, i32) {
    %c0_i32 = arith.constant 0 : i32
    %c0_i32_0 = arith.constant 0 : i32
    %c0_i32_1 = arith.constant 0 : i32
    return %c0_i32, %c0_i32_0 : i32, i32
  }
  func.func @transform_5(%arg0: i32) -> (i32, i32) {
    %c0_i32 = arith.constant 0 : i32
    %c0_i32_0 = arith.constant 0 : i32
    %c0_i32_1 = arith.constant 0 : i32
    return %c0_i32, %c0_i32_0 : i32, i32
  }
  func.func @transform_6(%arg0: i32) -> (i32, i32) {
    %c0_i32 = arith.constant 0 : i32
    %c0_i32_0 = arith.constant 0 : i32
    %c0_i32_1 = arith.constant 0 : i32
    return %c0_i32, %c0_i32_0 : i32, i32
  }
  func.func @transform_7(%arg0: i32) -> (i32, i32, i32) {
    %c0_i32 = arith.constant 0 : i32
    %c0_i32_0 = arith.constant 0 : i32
    %c0_i32_1 = arith.constant 0 : i32
    return %arg0, %c0_i32, %c0_i32_0 : i32, i32, i32
  }
}

</mosaic_0001>

<llo_original>
// kernel: club_forward.1
$region0: #{club_forward.1}
  #allocation0 [shape = 'u32[]', space=smem, size = 0x4, offset = 0x4, fixed_abs, tag = 'smem constant byte address 0x4 - core index']
  #allocation1 [shape = 'u32[144,128]{1,0:T(1,128)}', space=vmem, size = 0x12000, scoped, tag = 'internal scratch']
  %s0 = inlined_call_operand.vmem [shape: f32[32,200], index: 0, kind: input, shape index: {}]
  %s1 = inlined_call_operand.hbm [shape: f32[16,200], index: 1, kind: input, shape index: {}]
  %s2 = inlined_call_operand.hbm [shape: f32[16,200], index: 2, kind: input, shape index: {}]
  %s3 = inlined_call_operand.vmem [shape: bf16[32,32], index: 3, kind: input, shape index: {}]
  %s4 = inlined_call_operand.vmem [shape: f32[32,1], index: 4, kind: input, shape index: {}]
  %s5 = inlined_call_operand.vmem [shape: bf16[32,32], index: 5, kind: input, shape index: {}]
  %s6 = inlined_call_operand.vmem [shape: f32[32,1], index: 6, kind: input, shape index: {}]
  %s7 = inlined_call_operand.vmem [shape: f32[2,1,1], index: 7, kind: output, shape index: {}]
  %s8 = sld [smem:[#allocation0]]
  $region107: #{club_forward.1} parent=0
    _
  %s10 = ssub.s32 1, %s8
  %s11 = scalar_select 0, %s10, %s8
  $region1: #{club_forward.1} parent=0
    #allocation2 [shape = 'u8[32768]{0}', space=vmem, size = 0x8000, scoped, tag = 'input window, operand 0']
    #allocation3 [shape = 'u8[16384]{0}', space=vmem, size = 0x4000, scoped, tag = 'input window, operand 1']
    #allocation4 [shape = 's32[2]{0}', space=sflag, size = 0x8, scoped, tag = 'scoped memory for club_forward.1']
    #allocation5 [shape = 'u8[16384]{0}', space=vmem, size = 0x4000, scoped, tag = 'input window, operand 2']
    #allocation6 [shape = 's32[2]{0}', space=sflag, size = 0x8, scoped, tag = 'scoped memory for club_forward.1']
    %12 = vsyncpa [#allocation4], 0
    %s13 = scalar_lea.sflag [#allocation4], 1
    %14 = vsyncpa %s13, 0
    %15 = vsyncpa [#allocation6], 0
    %s16 = scalar_lea.sflag [#allocation6], 1
    %17 = vsyncpa %s16, 0
    loop: start=0, step=1, limit=4
    $region2: #{club_forward.1} parent=1 // loop_pre_header
      _
    $region3: #{club_forward.1} parent=1 // loop_header
      %s19 = sphi 0, %s23
      %p20 = scmp.ge.s32.totalorder %s19, 4
      %s29 = sphi 0, %s31
      %s32 = sphi 0, %s29
      %s33 = sphi 0, %s32
      %s49 = sphi 0, %s33
      %s55 = sphi 0, %s57
      %s58 = sphi 0, %s55
      %s59 = sphi 0, %s58
      %s75 = sphi 0, %s59
      %s81 = sphi 0, %s83
      %s84 = sphi 0, %s81
      %s85 = sphi 0, %s84
      %s101 = sphi 0, %s85
      %s105 = sphi 0, %s105
      %s107 = sphi 0, %s105
      %s108 = sphi 0, %s107
      %s122 = sphi 0, %s108
      %s126 = sphi 0, %s126
      %s128 = sphi 0, %s126
      %s129 = sphi 0, %s128
      %s143 = sphi 0, %s129
      %s147 = sphi 0, %s147
      %s149 = sphi 0, %s147
      %s150 = sphi 0, %s149
      %s164 = sphi 0, %s150
      %s168 = sphi 0, %s168
      %s170 = sphi 0, %s168
      %s171 = sphi 0, %s170
      %s185 = sphi 0, %s171
      %s191 = sphi 0, %s193
      %s194 = sphi 0, %s191
      %s195 = sphi 0, %s194
      %s211 = sphi 0, %s195
    $region4: #{club_forward.1} parent=1 // loop_header_branch
      %22 = sbr.rel (%p20) target = $region8
    $region5: #{club_forward.1} parent=1 // loop_body
      %s24 = ssub.s32 %s19, 1
      %s25 = ssub.s32 %s19, 2
      %s26 = sadd.s32 %s19, 1
      %s27 = ssub.s32 %s19, %s26
      %p28 = scmp.eq.s32.totalorder %s27, 0
      %s30 = sadd.s32 %s29, 1
      %s31 = scalar_select %p28, %s29, %s30
      %p34 = pneg %p28
      %p35 = scmp.eq.s32.totalorder %s19, 1
      %p36 = por %p34, %p35
      %p37 = scmp.ne.s32.totalorder %s29, %s32
      %p38 = scmp.eq.s32.totalorder %s19, 0
      %p39 = por %p37, %p38
      %p40 = scmp.ne.s32.totalorder %s29, %s32
      %p41 = scmp.eq.s32.totalorder %s24, 1
      %p42 = por %p40, %p41
      %p43 = scmp.ne.s32.totalorder %s32, %s33
      %p44 = scmp.eq.s32.totalorder %s24, 0
      %p45 = por %p43, %p44
      %p46 = scmp.ne.s32.totalorder %s32, %s33
      %p47 = scmp.eq.s32.totalorder %s25, 1
      %p48 = por %p46, %p47
      %p50 = scmp.ne.s32.totalorder %s33, %s49
      %p51 = scmp.eq.s32.totalorder %s25, 0
      %p52 = por %p50, %p51
      %s53 = ssub.s32 %s19, %s26
      %p54 = scmp.eq.s32.totalorder %s53, 0
      %s56 = sadd.s32 %s55, 1
      %s57 = scalar_select %p54, %s55, %s56
      %p60 = pneg %p54
      %p61 = scmp.eq.s32.totalorder %s19, 1
      %p62 = por %p60, %p61
      %p63 = scmp.ne.s32.totalorder %s55, %s58
      %p64 = scmp.eq.s32.totalorder %s19, 0
      %p65 = por %p63, %p64
      %p66 = scmp.ne.s32.totalorder %s55, %s58
      %p67 = scmp.eq.s32.totalorder %s24, 1
      %p68 = por %p66, %p67
      %p69 = scmp.ne.s32.totalorder %s58, %s59
      %p70 = scmp.eq.s32.totalorder %s24, 0
      %p71 = por %p69, %p70
      %p72 = scmp.ne.s32.totalorder %s58, %s59
      %p73 = scmp.eq.s32.totalorder %s25, 1
      %p74 = por %p72, %p73
      %p76 = scmp.ne.s32.totalorder %s59, %s75
      %p77 = scmp.eq.s32.totalorder %s25, 0
      %p78 = por %p76, %p77
      %s79 = ssub.s32 %s19, %s26
      %p80 = scmp.eq.s32.totalorder %s79, 0
      %s82 = sadd.s32 %s81, 1
      %s83 = scalar_select %p80, %s81, %s82
      %p86 = pneg %p80
      %p87 = scmp.eq.s32.totalorder %s19, 1
      %p88 = por %p86, %p87
      %p89 = scmp.ne.s32.totalorder %s81, %s84
      %p90 = scmp.eq.s32.totalorder %s19, 0
      %p91 = por %p89, %p90
      %p92 = scmp.ne.s32.totalorder %s81, %s84
      %p93 = scmp.eq.s32.totalorder %s24, 1
      %p94 = por %p92, %p93
      %p95 = scmp.ne.s32.totalorder %s84, %s85
      %p96 = scmp.eq.s32.totalorder %s24, 0
      %p97 = por %p95, %p96
      %p98 = scmp.ne.s32.totalorder %s84, %s85
      %p99 = scmp.eq.s32.totalorder %s25, 1
      %p100 = por %p98, %p99
      %p102 = scmp.ne.s32.totalorder %s85, %s101
      %p103 = scmp.eq.s32.totalorder %s25, 0
      %p104 = por %p102, %p103
      %s106 = sadd.s32 %s105, 1
      %p109 = scmp.eq.s32.totalorder %s19, 1
      %p110 = scmp.ne.s32.totalorder %s105, %s107
      %p111 = scmp.eq.s32.totalorder %s19, 0
      %p112 = por %p110, %p111
      %p113 = scmp.ne.s32.totalorder %s105, %s107
      %p114 = scmp.eq.s32.totalorder %s24, 1
      %p115 = por %p113, %p114
      %p116 = scmp.ne.s32.totalorder %s107, %s108
      %p117 = scmp.eq.s32.totalorder %s24, 0
      %p118 = por %p116, %p117
      %p119 = scmp.ne.s32.totalorder %s107, %s108
      %p120 = scmp.eq.s32.totalorder %s25, 1
      %p121 = por %p119, %p120
      %p123 = scmp.ne.s32.totalorder %s108, %s122
      %p124 = scmp.eq.s32.totalorder %s25, 0
      %p125 = por %p123, %p124
      %s127 = sadd.s32 %s126, 1
      %p130 = scmp.eq.s32.totalorder %s19, 1
      %p131 = scmp.ne.s32.totalorder %s126, %s128
      %p132 = scmp.eq.s32.totalorder %s19, 0
      %p133 = por %p131, %p132
      %p134 = scmp.ne.s32.totalorder %s126, %s128
      %p135 = scmp.eq.s32.totalorder %s24, 1
      %p136 = por %p134, %p135
      %p137 = scmp.ne.s32.totalorder %s128, %s129
      %p138 = scmp.eq.s32.totalorder %s24, 0
      %p139 = por %p137, %p138
      %p140 = scmp.ne.s32.totalorder %s128, %s129
      %p141 = scmp.eq.s32.totalorder %s25, 1
      %p142 = por %p140, %p141
      %p144 = scmp.ne.s32.totalorder %s129, %s143
      %p145 = scmp.eq.s32.totalorder %s25, 0
      %p146 = por %p144, %p145
      %s148 = sadd.s32 %s147, 1
      %p151 = scmp.eq.s32.totalorder %s19, 1
      %p152 = scmp.ne.s32.totalorder %s147, %s149
      %p153 = scmp.eq.s32.totalorder %s19, 0
      %p154 = por %p152, %p153
      %p155 = scmp.ne.s32.totalorder %s147, %s149
      %p156 = scmp.eq.s32.totalorder %s24, 1
      %p157 = por %p155, %p156
      %p158 = scmp.ne.s32.totalorder %s149, %s150
      %p159 = scmp.eq.s32.totalorder %s24, 0
      %p160 = por %p158, %p159
      %p161 = scmp.ne.s32.totalorder %s149, %s150
      %p162 = scmp.eq.s32.totalorder %s25, 1
      %p163 = por %p161, %p162
      %p165 = scmp.ne.s32.totalorder %s150, %s164
      %p166 = scmp.eq.s32.totalorder %s25, 0
      %p167 = por %p165, %p166
      %s169 = sadd.s32 %s168, 1
      %p172 = scmp.eq.s32.totalorder %s19, 1
      %p173 = scmp.ne.s32.totalorder %s168, %s170
      %p174 = scmp.eq.s32.totalorder %s19, 0
      %p175 = por %p173, %p174
      %p176 = scmp.ne.s32.totalorder %s168, %s170
      %p177 = scmp.eq.s32.totalorder %s24, 1
      %p178 = por %p176, %p177
      %p179 = scmp.ne.s32.totalorder %s170, %s171
      %p180 = scmp.eq.s32.totalorder %s24, 0
      %p181 = por %p179, %p180
      %p182 = scmp.ne.s32.totalorder %s170, %s171
      %p183 = scmp.eq.s32.totalorder %s25, 1
      %p184 = por %p182, %p183
      %p186 = scmp.ne.s32.totalorder %s171, %s185
      %p187 = scmp.eq.s32.totalorder %s25, 0
      %p188 = por %p186, %p187
      %s189 = ssub.s32 %s19, %s26
      %p190 = scmp.eq.s32.totalorder %s189, 0
      %s192 = sadd.s32 %s191, 1
      %s193 = scalar_select %p190, %s191, %s192
      %p196 = pneg %p190
      %p197 = scmp.eq.s32.totalorder %s19, 1
      %p198 = por %p196, %p197
      %p199 = scmp.ne.s32.totalorder %s191, %s194
      %p200 = scmp.eq.s32.totalorder %s19, 0
      %p201 = por %p199, %p200
      %p202 = scmp.ne.s32.totalorder %s191, %s194
      %p203 = scmp.eq.s32.totalorder %s24, 1
      %p204 = por %p202, %p203
      %p205 = scmp.ne.s32.totalorder %s194, %s195
      %p206 = scmp.eq.s32.totalorder %s24, 0
      %p207 = por %p205, %p206
      %p208 = scmp.ne.s32.totalorder %s194, %s195
      %p209 = scmp.eq.s32.totalorder %s25, 1
      %p210 = por %p208, %p209
      %p212 = scmp.ne.s32.totalorder %s195, %s211
      %p213 = scmp.eq.s32.totalorder %s25, 0
      %p214 = por %p212, %p213
      %p215 = scmp.le.s32.totalorder 1, %s19
      %p216 = scmp.lt.s32.totalorder %s19, 3
      %p217 = pnand %p215, %p216
      %p218 = pneg %p217
      // Predicated region
      $region9: #{club_forward.1} parent=5 // pred_check
        _
      $region10: #{club_forward.1} parent=5 // pred_check_branch
        %220 = sbr.rel (%p217) target = $region12
      $region11: #{club_forward.1} parent=5 // pred_region
        %s221 = ssub.s32 %s19, 1
        // Predicated region
        $region13: #{club_forward.1} parent=11 // pred_check
          %p222 = pneg %p118
        $region14: #{club_forward.1} parent=11 // pred_check_branch
          %224 = sbr.rel (%p222) target = $region16
        $region15: #{club_forward.1} parent=11 // pred_region
          _
        $region16: #{club_forward.1} parent=11 // pred_fallthru
          _
        // Predicated region
        $region17: #{club_forward.1} parent=11 // pred_check
          %p225 = pneg %p139
        $region18: #{club_forward.1} parent=11 // pred_check_branch
          %227 = sbr.rel (%p225) target = $region20
        $region19: #{club_forward.1} parent=11 // pred_region
          _
        $region20: #{club_forward.1} parent=11 // pred_fallthru
          _
        // Predicated region
        $region21: #{club_forward.1} parent=11 // pred_check
          %p228 = pneg %p160
        $region22: #{club_forward.1} parent=11 // pred_check_branch
          %230 = sbr.rel (%p228) target = $region24
        $region23: #{club_forward.1} parent=11 // pred_region
          _
        $region24: #{club_forward.1} parent=11 // pred_fallthru
          _
        // Predicated region
        $region25: #{club_forward.1} parent=11 // pred_check
          %p231 = pneg %p181
        $region26: #{club_forward.1} parent=11 // pred_check_branch
          %233 = sbr.rel (%p231) target = $region28
        $region27: #{club_forward.1} parent=11 // pred_region
          _
        $region28: #{club_forward.1} parent=11 // pred_fallthru
          _
      $region12: #{club_forward.1} parent=5 // pred_fallthru
        _
      %p234 = scmp.lt.s32.totalorder %s19, 2
      // Predicated region
      $region29: #{club_forward.1} parent=5 // pred_check
        %p235 = pneg %p234
      $region30: #{club_forward.1} parent=5 // pred_check_branch
        %237 = sbr.rel (%p235) target = $region32
      $region31: #{club_forward.1} parent=5 // pred_region
        // Predicated region
        $region33: #{club_forward.1} parent=31 // pred_check
          %p238 = pneg %p39
        $region34: #{club_forward.1} parent=31 // pred_check_branch
          %240 = sbr.rel (%p238) target = $region36
        $region35: #{club_forward.1} parent=31 // pred_region
          %s241 = sand.u32 %s29, 1
          %s242 = sand.u32 %s29, 1
          %s243 = smul.addr %s242, 32
          %s244 = scalar_lea.vmem [#allocation2], %s243
          %s245 = smul.addr %s19, 8
          %s246 = scalar_lea.vmem %s0, %s245
          // Predicated region
          $region37: #{club_forward.1} parent=35 // pred_check
            _
          $region38: #{club_forward.1} parent=35 // pred_check_branch
            %248 = sbr.rel (0) target = $region40
          $region39: #{club_forward.1} parent=35 // pred_region
            // Predicated region
            $region41: #{club_forward.1} parent=39 // pred_check
              _
            $region42: #{club_forward.1} parent=39 // pred_check_branch
              %250 = sbr.rel (0) target = $region44
            $region43: #{club_forward.1} parent=39 // pred_region
              // Predicated region
              $region56: #{club_forward.1} parent=43 // pred_check
                _
              $region57: #{club_forward.1} parent=43 // pred_check_branch
                %271 = sbr.rel (0) target = $region59
              $region58: #{club_forward.1} parent=43 // pred_region
                loop: start=0, step=1, limit=1
                $region60: #{club_forward.1} parent=58 // loop_pre_header
                  _
                $region61: #{club_forward.1} parent=58 // loop_header
                  %s273 = sphi 0, %s277
                  %p274 = scmp.ge.s32.totalorder %s273, 1
                  %s278 = sphi %s246, %s246
                  %s279 = sphi %s244, %s244
                $region62: #{club_forward.1} parent=58 // loop_header_branch
                  %276 = sbr.rel (%p274) target = $region66
                $region63: #{club_forward.1} parent=58 // loop_body
                  %v280 = vld [vmem:[%s278] sm:$0xff]
                  %281 = vst [vmem:[%s279] sm:$0xff] %v280
                  %v282 = vld [vmem:[%s278 + $0x10] sm:$0xff]
                  %283 = vst [vmem:[%s279 + $0x8] sm:$0xff] %v282
                  %v284 = vld [vmem:[%s278 + $0x20] sm:$0xff]
                  %285 = vst [vmem:[%s279 + $0x10] sm:$0xff] %v284
                  %v286 = vld [vmem:[%s278 + $0x30] sm:$0xff]
                  %287 = vst [vmem:[%s279 + $0x18] sm:$0xff] %v286
                $region64: #{club_forward.1} parent=58 // loop_footer
                  %s277 = sadd.s32 1, %s273
                $region65: #{club_forward.1} parent=58 // loop_footer_branch
                  %272 = sbr.rel target = $region61
                $region66: #{club_forward.1} parent=58 // loop_exit
                  _
              $region59: #{club_forward.1} parent=43 // pred_fallthru
                _
              // Predicated region
              $region67: #{club_forward.1} parent=43 // pred_check
                _
              $region68: #{club_forward.1} parent=43 // pred_check_branch
                %289 = sbr.rel target = $region70
              $region69: #{club_forward.1} parent=43 // pred_region
                _
              $region70: #{club_forward.1} parent=43 // pred_fallthru
                _
            $region44: #{club_forward.1} parent=39 // pred_fallthru
              _
            // Predicated region
            $region45: #{club_forward.1} parent=39 // pred_check
              _
            $region46: #{club_forward.1} parent=39 // pred_check_branch
              %252 = sbr.rel target = $region48
            $region47: #{club_forward.1} parent=39 // pred_region
              loop: start=0, step=1, limit=1
              $region49: #{club_forward.1} parent=47 // loop_pre_header
                _
              $region50: #{club_forward.1} parent=47 // loop_header
                %s255 = sphi 0, %s259
                %p256 = scmp.ge.s32.totalorder %s255, 1
                %s260 = sphi %s246, %s246
                %s261 = sphi %s244, %s244
              $region51: #{club_forward.1} parent=47 // loop_header_branch
                %258 = sbr.rel (%p256) target = $region55
              $region52: #{club_forward.1} parent=47 // loop_body
                %v262 = vld [vmem:[%s260] sm:$0xff]
                %263 = vst [vmem:[%s261] sm:$0xff] %v262
                %v264 = vld [vmem:[%s260 + $0x10] sm:$0xff]
                %265 = vst [vmem:[%s261 + $0x8] sm:$0xff] %v264
                %v266 = vld [vmem:[%s260 + $0x20] sm:$0xff]
                %267 = vst [vmem:[%s261 + $0x10] sm:$0xff] %v266
                %v268 = vld [vmem:[%s260 + $0x30] sm:$0xff]
                %269 = vst [vmem:[%s261 + $0x18] sm:$0xff] %v268
              $region53: #{club_forward.1} parent=47 // loop_footer
                %s259 = sadd.s32 1, %s255
              $region54: #{club_forward.1} parent=47 // loop_footer_branch
                %254 = sbr.rel target = $region50
              $region55: #{club_forward.1} parent=47 // loop_exit
                _
            $region48: #{club_forward.1} parent=39 // pred_fallthru
              _
          $region40: #{club_forward.1} parent=35 // pred_fallthru
            _
          %290 = vnop
        $region36: #{club_forward.1} parent=31 // pred_fallthru
          _
        // Predicated region
        $region71: #{club_forward.1} parent=31 // pred_check
          %p291 = pneg %p65
        $region72: #{club_forward.1} parent=31 // pred_check_branch
          %293 = sbr.rel (%p291) target = $region74
        $region73: #{club_forward.1} parent=31 // pred_region
          %s294 = sand.u32 %s55, 1
          %s295 = scalar_lea.sflag [#allocation4], %s294
          %s296 = sand.u32 %s55, 1
          %s297 = smul.addr %s296, 16
          %s298 = scalar_lea.vmem [#allocation3], %s297
          %s300 = ssub.s32 256, 256
          %301 = vsyncadd %s295, %s300
          %s302 = smul.addr %s19, 128
          %s303 = scalar_lea.hbm %s1, %s302
          %s304 = sshll.u32 %s298, 4
          %s305 = int_to_ptr.vmem [resolvable:$true] %s304
          %310 = dma.hbm_to_vmem [thread:$0]  %s303, 256, %s305, %s295, 256, 128, 8
        $region74: #{club_forward.1} parent=31 // pred_fallthru
          _
        // Predicated region
        $region75: #{club_forward.1} parent=31 // pred_check
          %p311 = pneg %p91
        $region76: #{club_forward.1} parent=31 // pred_check_branch
          %313 = sbr.rel (%p311) target = $region78
        $region77: #{club_forward.1} parent=31 // pred_region
          %s314 = sand.u32 %s81, 1
          %s315 = scalar_lea.sflag [#allocation6], %s314
          %s316 = sand.u32 %s81, 1
          %s317 = smul.addr %s316, 16
          %s318 = scalar_lea.vmem [#allocation5], %s317
          %s320 = ssub.s32 256, 256
          %321 = vsyncadd %s315, %s320
          %s322 = smul.addr %s19, 128
          %s323 = scalar_lea.hbm %s2, %s322
          %s324 = sshll.u32 %s318, 4
          %s325 = int_to_ptr.vmem [resolvable:$true] %s324
          %330 = dma.hbm_to_vmem [thread:$0]  %s323, 256, %s325, %s315, 256, 128, 8
        $region78: #{club_forward.1} parent=31 // pred_fallthru
          _
      $region32: #{club_forward.1} parent=5 // pred_fallthru
        _
      %p331 = scmp.le.s32.totalorder 1, %s19
      %p332 = scmp.lt.s32.totalorder %s19, 3
      %p333 = pnand %p331, %p332
      %p334 = pneg %p333
      // Predicated region
      $region79: #{club_forward.1} parent=5 // pred_check
        _
      $region80: #{club_forward.1} parent=5 // pred_check_branch
        %336 = sbr.rel (%p333) target = $region82
      $region81: #{club_forward.1} parent=5 // pred_region
        %s337 = ssub.s32 %s19, 1
        %s338 = sand.u32 %s32, 1
        %s339 = sand.u32 %s32, 1
        %s340 = smul.addr %s339, 32
        %s341 = scalar_lea.vmem [#allocation2], %s340
        // Predicated region
        $region83: #{club_forward.1} parent=81 // pred_check
          %p342 = pneg %p45
        $region84: #{club_forward.1} parent=81 // pred_check_branch
          %344 = sbr.rel (%p342) target = $region86
        $region85: #{club_forward.1} parent=81 // pred_region
          _
        $region86: #{club_forward.1} parent=81 // pred_fallthru
          _
        %s345 = sand.u32 %s58, 1
        %s346 = scalar_lea.sflag [#allocation4], %s345
        %s347 = sand.u32 %s58, 1
        %s348 = smul.addr %s347, 16
        %s349 = scalar_lea.vmem [#allocation3], %s348
        // Predicated region
        $region87: #{club_forward.1} parent=81 // pred_check
          %p350 = pneg %p71
        $region88: #{club_forward.1} parent=81 // pred_check_branch
          %352 = sbr.rel (%p350) target = $region90
        $region89: #{club_forward.1} parent=81 // pred_region
          %353 = dma.done %s346, 256
        $region90: #{club_forward.1} parent=81 // pred_fallthru
          _
        %s354 = sand.u32 %s84, 1
        %s355 = scalar_lea.sflag [#allocation6], %s354
        %s356 = sand.u32 %s84, 1
        %s357 = smul.addr %s356, 16
        %s358 = scalar_lea.vmem [#allocation5], %s357
        // Predicated region
        $region91: #{club_forward.1} parent=81 // pred_check
          %p359 = pneg %p97
        $region92: #{club_forward.1} parent=81 // pred_check_branch
          %361 = sbr.rel (%p359) target = $region94
        $region93: #{club_forward.1} parent=81 // pred_region
          %362 = dma.done %s355, 256
        $region94: #{club_forward.1} parent=81 // pred_fallthru
          _
        %s363 = sand.u32 %s32, 1
        %s364 = sand.u32 %s32, 1
        %s365 = smul.addr %s364, 32
        %s366 = scalar_lea.vmem [#allocation2], %s365
        %p367 = pneg %p45
        %p368 = pneg %p42
        %s369 = sand.u32 %s58, 1
        %s370 = scalar_lea.sflag [#allocation4], %s369
        %s371 = sand.u32 %s58, 1
        %s372 = smul.addr %s371, 16
        %s373 = scalar_lea.vmem [#allocation3], %s372
        %p374 = pneg %p71
        %p375 = pneg %p68
        %s376 = sand.u32 %s84, 1
        %s377 = scalar_lea.sflag [#allocation6], %s376
        %s378 = sand.u32 %s84, 1
        %s379 = smul.addr %s378, 16
        %s380 = scalar_lea.vmem [#allocation5], %s379
        %p381 = pneg %p97
        %p382 = pneg %p94
        %p383 = pneg %p118
        %p384 = pneg %p115
        %p385 = pneg %p139
        %p386 = pneg %p136
        %p387 = pneg %p160
        %p388 = pneg %p157
        %p389 = pneg %p181
        %p390 = pneg %p178
        %p391 = pneg %p207
        %p392 = pneg %p204
        %p393 = scmp.lt.s32.totalorder %s24, 1
        %s394 = scalar_select %p393, %s24, 1
        %s395 = scalar_lea.vmem %s7, %s394
        %p396 = scmp.lt.s32.totalorder %s24, 1
        %s397 = scalar_select %p396, %s24, 1
        %s398 = scalar_lea.vmem %s7, %s397
        %v400 = vld [vmem:[%s341] sm:$0xff]
        %v401 = vld [vmem:[%s341 + $0x8] sm:$0xff]
        %v402 = vld [vmem:[%s341 + $0x10] sm:$0xff]
        %v403 = vld [vmem:[%s341 + $0x18] sm:$0xff]
        %v404 = vpack.c.bf16 %v401, %v400
        %v405 = vpack.c.bf16 %v403, %v402
        %v406 = vld [vmem:[%s3] sm:$0xf]
        %v407 = vld [vmem:[%s3 + $0x4] sm:$0xf]
        %v408 = vld [vmem:[%s3 + $0x8] sm:$0xf]
        %v409 = vld [vmem:[%s3 + $0xc] sm:$0xf]
        %v410 = vld [vmem:[%s4] sm:$0xff]
        %v411 = vld [vmem:[%s4 + $0x8] sm:$0xff]
        %v412 = vld [vmem:[%s4 + $0x10] sm:$0xff]
        %v413 = vld [vmem:[%s4 + $0x18] sm:$0xff]
        %415 = vset.pattern.permute.xlu0 0
        %416 = vperm.xlu0 %415, %v410
        %v417 = vpop.permute.xlu0 %416
        %420 = vset.pattern.permute.xlu0 0
        %421 = vperm.xlu0 %420, %v411
        %v422 = vpop.permute.xlu0 %421
        %425 = vset.pattern.permute.xlu0 0
        %426 = vperm.xlu0 %425, %v412
        %v427 = vpop.permute.xlu0 %426
        %430 = vset.pattern.permute.xlu0 0
        %431 = vperm.xlu0 %430, %v413
        %v432 = vpop.permute.xlu0 %431
        %v438 = vunpack.c.l.b16 %v406
        %v439 = vunpack.c.l.b16 %v407
        %v440 = vunpack.c.l.b16 %v408
        %v441 = vunpack.c.l.b16 %v409
        %v442 = vpack.c.b16 %v439, %v438
        %v443 = vpack.c.b16 %v441, %v440
        %vm444 = vcmask 261120
        %v446 = vsel %vm444, %v442, 0
        %v449 = vsel %vm444, %v443, 0
        %451 = vmatprep.subr.bf16.mxu0 0
        %452 = vmatpush1.bf16.msra.mxu0 %v404
        %453 = vmatprep.subr.bf16.mxu0 0
        %454 = vmatpush1.bf16.msra.mxu0 %v405
        %455 = vmatprep.subr.bf16.mxu0 0
        %456 = vmatpush1.bf16.msra.mxu0 0
        %457 = vmatprep.subr.bf16.mxu0 0
        %458 = vmatpush1.bf16.msra.mxu0 0
        %459 = vmatprep.subr.bf16.mxu0 0
        %460 = vmatpush1.bf16.msra.mxu0 0
        %461 = vmatprep.subr.bf16.mxu0 0
        %462 = vmatpush1.bf16.msra.mxu0 0
        %463 = vmatprep.subr.bf16.mxu0 0
        %464 = vmatpush1.bf16.msra.mxu0 0
        %465 = vmatprep.subr.bf16.mxu0 0
        %466 = vmatpush1.bf16.msra.mxu0 0
        %467 = vmatprep.subr.bf16.mxu0 0
        %468 = vmatpush1.bf16.msra.mxu0 0
        %469 = vmatprep.subr.bf16.mxu0 0
        %470 = vmatpush1.bf16.msra.mxu0 0
        %471 = vmatprep.subr.bf16.mxu0 0
        %472 = vmatpush1.bf16.msra.mxu0 0
        %473 = vmatprep.subr.bf16.mxu0 0
        %474 = vmatpush1.bf16.msra.mxu0 0
        %475 = vmatprep.subr.bf16.mxu0 0
        %476 = vmatpush1.bf16.msra.mxu0 0
        %477 = vmatprep.subr.bf16.mxu0 0
        %478 = vmatpush1.bf16.msra.mxu0 0
        %479 = vmatprep.subr.bf16.mxu0 0
        %480 = vmatpush1.bf16.msra.mxu0 0
        %481 = vmatprep.subr.bf16.mxu0 0
        %482 = vmatpush1.bf16.msra.mxu0 0
        %483 = vmatprep.mubr.bf16.mxu0 0
        %484 = vmatmul.mubr.bf16.gmra.mrb[0].mxu0 %v446
        %v485 = vpop.f32.mrb[0].mxu0
        %v486 = vadd.f32 %v417, %v485
        %v487 = vpop.f32.mrb[0].mxu0
        %v488 = vpop.f32.mrb[0].mxu0
        %v489 = vadd.f32 %v422, %v488
        %v490 = vpop.f32.mrb[0].mxu0
        %491 = vmatprep.mubr.bf16.mxu0 0
        %492 = vmatmul.mubr.bf16.gmra.mrb[0].mxu0 %v449
        %v493 = vpop.f32.mrb[0].mxu0
        %v494 = vadd.f32 %v427, %v493
        %v495 = vpop.f32.mrb[0].mxu0
        %v496 = vpop.f32.mrb[0].mxu0
        %v497 = vadd.f32 %v432, %v496
        %v498 = vpop.f32.mrb[0].mxu0
        %499 = vdwg.mxu0
        %v500 = vmax.f32 %v486, 0.0
        %v501 = vmax.f32 %v489, 0.0
        %v502 = vmax.f32 %v494, 0.0
        %v503 = vmax.f32 %v497, 0.0
        %v504 = vld [vmem:[%s5] sm:$0xf]
        %v505 = vld [vmem:[%s5 + $0x4] sm:$0xf]
        %v506 = vld [vmem:[%s5 + $0x8] sm:$0xf]
        %v507 = vld [vmem:[%s5 + $0xc] sm:$0xf]
        %v508 = vpack.c.bf16 %v501, %v500
        %v509 = vpack.c.bf16 %v503, %v502
        %v510 = vld [vmem:[%s6] sm:$0xff]
        %v511 = vld [vmem:[%s6 + $0x8] sm:$0xff]
        %v512 = vld [vmem:[%s6 + $0x10] sm:$0xff]
        %v513 = vld [vmem:[%s6 + $0x18] sm:$0xff]
        %515 = vset.pattern.permute.xlu0 0
        %516 = vperm.xlu0 %515, %v510
        %v517 = vpop.permute.xlu0 %516
        %520 = vset.pattern.permute.xlu0 0
        %521 = vperm.xlu0 %520, %v511
        %v522 = vpop.permute.xlu0 %521
        %525 = vset.pattern.permute.xlu0 0
        %526 = vperm.xlu0 %525, %v512
        %v527 = vpop.permute.xlu0 %526
        %530 = vset.pattern.permute.xlu0 0
        %531 = vperm.xlu0 %530, %v513
        %v532 = vpop.permute.xlu0 %531
        %v538 = vunpack.c.l.b16 %v504
        %v539 = vunpack.c.l.b16 %v505
        %v540 = vunpack.c.l.b16 %v506
        %v541 = vunpack.c.l.b16 %v507
        %v542 = vpack.c.b16 %v539, %v538
        %v543 = vpack.c.b16 %v541, %v540
        %v545 = vsel %vm444, %v542, 0
        %v548 = vsel %vm444, %v543, 0
        %550 = vmatprep.subr.bf16.mxu0 0
        %551 = vmatpush1.bf16.msra.mxu0 %v508
        %552 = vmatprep.subr.bf16.mxu0 0
        %553 = vmatpush1.bf16.msra.mxu0 %v509
        %554 = vmatprep.subr.bf16.mxu0 0
        %555 = vmatpush1.bf16.msra.mxu0 0
        %556 = vmatprep.subr.bf16.mxu0 0
        %557 = vmatpush1.bf16.msra.mxu0 0
        %558 = vmatprep.subr.bf16.mxu0 0
        %559 = vmatpush1.bf16.msra.mxu0 0
        %560 = vmatprep.subr.bf16.mxu0 0
        %561 = vmatpush1.bf16.msra.mxu0 0
        %562 = vmatprep.subr.bf16.mxu0 0
        %563 = vmatpush1.bf16.msra.mxu0 0
        %564 = vmatprep.subr.bf16.mxu0 0
        %565 = vmatpush1.bf16.msra.mxu0 0
        %566 = vmatprep.subr.bf16.mxu0 0
        %567 = vmatpush1.bf16.msra.mxu0 0
        %568 = vmatprep.subr.bf16.mxu0 0
        %569 = vmatpush1.bf16.msra.mxu0 0
        %570 = vmatprep.subr.bf16.mxu0 0
        %571 = vmatpush1.bf16.msra.mxu0 0
        %572 = vmatprep.subr.bf16.mxu0 0
        %573 = vmatpush1.bf16.msra.mxu0 0
        %574 = vmatprep.subr.bf16.mxu0 0
        %575 = vmatpush1.bf16.msra.mxu0 0
        %576 = vmatprep.subr.bf16.mxu0 0
        %577 = vmatpush1.bf16.msra.mxu0 0
        %578 = vmatprep.subr.bf16.mxu0 0
        %579 = vmatpush1.bf16.msra.mxu0 0
        %580 = vmatprep.subr.bf16.mxu0 0
        %581 = vmatpush1.bf16.msra.mxu0 0
        %582 = vmatprep.mubr.bf16.mxu0 0
        %583 = vmatmul.mubr.bf16.gmra.mrb[0].mxu0 %v545
        %v584 = vpop.f32.mrb[0].mxu0
        %v585 = vadd.f32 %v517, %v584
        %v586 = vpop.f32.mrb[0].mxu0
        %v587 = vpop.f32.mrb[0].mxu0
        %v588 = vadd.f32 %v522, %v587
        %v589 = vpop.f32.mrb[0].mxu0
        %590 = vmatprep.mubr.bf16.mxu0 0
        %591 = vmatmul.mubr.bf16.gmra.mrb[0].mxu0 %v548
        %v592 = vpop.f32.mrb[0].mxu0
        %v593 = vadd.f32 %v527, %v592
        %v594 = vpop.f32.mrb[0].mxu0
        %v595 = vpop.f32.mrb[0].mxu0
        %v596 = vadd.f32 %v532, %v595
        %v597 = vpop.f32.mrb[0].mxu0
        %598 = vdwg.mxu0
        %v599 = vtanh.pop %v593
        %v600 = vtanh.pop %v596
        %v601 = vld [vmem:[%s349] sm:$0xff]
        %v602 = vld [vmem:[%s349 + $0x8] sm:$0xff]
        %v603 = vld [vmem:[%s358] sm:$0xff]
        %v604 = vld [vmem:[%s358 + $0x8] sm:$0xff]
        %v605 = vsub.f32 %v601, %v603
        %v606 = vsub.f32 %v602, %v604
        %v607 = vmul.f32 %v585, 2.0
        %v608 = vmul.f32 %v588, 2.0
        %v609 = vsub.f32 %v607, %v601
        %v610 = vsub.f32 %v608, %v602
        %v611 = vsub.f32 %v609, %v603
        %v612 = vsub.f32 %v610, %v604
        %v613 = vmul.f32 %v605, %v611
        %v614 = vmul.f32 %v606, %v612
        %v615 = vsub.f32 0.0, %v599
        %v616 = vsub.f32 0.0, %v600
        %v617 = vmul.f32 %v615, 1.442695
        %v618 = vpow.pop %v617
        %v619 = vmul.f32 %v616, 1.442695
        %v620 = vpow.pop %v619
        %v621 = vmul.f32 %v613, %v618
        %v622 = vmul.f32 %v614, %v620
        %s623 = smul.u32 %s24, 128
        %v624 = vlaneseq
        %v625 = vand.u32 %v624, 127
        %v626 = vstv %s623
        %v627 = vadd.s32 %v626, %v625
        %vm628 = vcmp.lt.s32.totalorder %v627, 200
        %v629 = vsel %vm628, %v621, 0.0
        %v630 = vsel %vm628, %v622, 0.0
        %v631 = vadd.f32 %v629, %v630
        %632 = vadd.xlane.f32.xlu0 %v631
        %v633 = vpop.xlane.xlu0 %632
        %v634 = vrot.slane %v633, 4
        %v635 = vadd.f32 %v633, %v634
        %v636 = vrot.slane %v635, 2
        %v637 = vadd.f32 %v635, %v636
        %v638 = vrot.slane %v637, 1
        %v639 = vadd.f32 %v637, %v638
        %s640 = vtos %v639
        %v641 = vstv %s640
        %vm642 = vcmask 0
        %643 = vst.msk [vmem:[%s398] sm:$0x1] %vm642, %v641
        %p644 = scmp.lt.s32.totalorder %s24, 1
        %s645 = scalar_select %p644, %s24, 1
        %s646 = scalar_lea.vmem %s7, %s645
        // Predicated region
        $region95: #{club_forward.1} parent=81 // pred_check
          %p647 = pneg %p204
        $region96: #{club_forward.1} parent=81 // pred_check_branch
          %649 = sbr.rel (%p647) target = $region98
        $region97: #{club_forward.1} parent=81 // pred_region
          _
        $region98: #{club_forward.1} parent=81 // pred_fallthru
          _
      $region82: #{club_forward.1} parent=5 // pred_fallthru
        _
      %p650 = scmp.le.s32.totalorder 2, %s19
      // Predicated region
      $region99: #{club_forward.1} parent=5 // pred_check
        %p651 = pneg %p650
      $region100: #{club_forward.1} parent=5 // pred_check_branch
        %653 = sbr.rel (%p651) target = $region102
      $region101: #{club_forward.1} parent=5 // pred_region
        %s654 = ssub.s32 %s19, 2
        // Predicated region
        $region103: #{club_forward.1} parent=101 // pred_check
          %p655 = pneg %p210
        $region104: #{club_forward.1} parent=101 // pred_check_branch
          %657 = sbr.rel (%p655) target = $region106
        $region105: #{club_forward.1} parent=101 // pred_region
          %p658 = scmp.lt.s32.totalorder %s25, 1
          %s659 = scalar_select %p658, %s25, 1
          %s660 = scalar_lea.vmem %s7, %s659
        $region106: #{club_forward.1} parent=101 // pred_fallthru
          _
      $region102: #{club_forward.1} parent=5 // pred_fallthru
        _
    $region6: #{club_forward.1} parent=1 // loop_footer
      %s23 = sadd.s32 1, %s19
    $region7: #{club_forward.1} parent=1 // loop_footer_branch
      %18 = sbr.rel target = $region3
    $region8: #{club_forward.1} parent=1 // loop_exit
      _
    %661 = vsyncpa [#allocation4], 1
    %s662 = scalar_lea.sflag [#allocation4], 1
    %663 = vsyncpa %s662, 1
    %664 = vsyncpa [#allocation6], 1
    %s665 = scalar_lea.sflag [#allocation6], 1
    %666 = vsyncpa %s665, 1

</llo_original>
